<compile_context>
chip_gen: v5e
topology: v5e:2x2
jax: 0.10.0
libtpu: 0.0.40
codegen_flags: <defaults>
</compile_context>

<pallas_src>
import jax
import jax.numpy as jnp
from jax.experimental import pallas as pl
from jax.experimental.pallas import tpu as pltpu


def _msca_kernel(x_ref, w1t_ref, b1_ref, w2t_ref, g_ref, o_ref):
    # x_ref : (1, C, THW)  tile of flattened-NCHW activations (HW on lanes)
    # w1t   : (Ch, C)      b1: (Ch, 1)
    # w2t   : (C, Ch)
    # g_ref : (1, C, 1)    per-batch global-branch vector (local b2 folded in)
    x = x_ref[0]                                                      # (C, THW)
    h = jnp.dot(w1t_ref[...], x, preferred_element_type=jnp.float32)  # (Ch, THW)
    h = jnp.maximum(h + b1_ref[...], 0.0)
    xl = jnp.dot(w2t_ref[...], h, preferred_element_type=jnp.float32)  # (C, THW)
    o_ref[0] = jax.nn.sigmoid(xl + g_ref[0]).astype(o_ref.dtype)      # lane-dense store


def _fold_bn(w, b, gamma, beta, mean, var, eps=1e-5):
    """Fold eval-mode BatchNorm into a preceding 1x1 conv (x @ w + b)."""
    scale = gamma / jnp.sqrt(var + eps)            # (out,)
    w_eff = w * scale[None, :]                     # (in, out)
    b_eff = b * scale + (beta - mean * scale)      # (out,)
    return w_eff, b_eff


def _pick_hw_tile(hw, cap):
    """Largest multiple of 128 that divides HW and is <= cap (else full HW)."""
    if hw % 128 != 0:
        return hw                      # fall back: block dim == full array dim
    t = max(128, min(cap, hw))
    t -= t % 128
    while hw % t != 0:
        t -= 128
    return t


def msca_forward(x_nchw, params, hw_tile_cap=2048):
    N, C, H, W = x_nchw.shape
    HW = H * W
    x = x_nchw.astype(jnp.float32)

    # --- fold BN into the 1x1 convs (both branches) ---
    lW1, lb1 = _fold_bn(params["l_w1"], params["l_b1"], *params["l_bn1"])
    lW2, lb2 = _fold_bn(params["l_w2"], params["l_b2"], *params["l_bn2"])
    gW1, gb1 = _fold_bn(params["g_w1"], params["g_b1"], *params["g_bn1"])
    gW2, gb2 = _fold_bn(params["g_w2"], params["g_b2"], *params["g_bn2"])

    # --- global branch: AdaptiveAvgPool2d(1) directly on NCHW + tiny matmuls ---
    gp = jnp.mean(x, axis=(2, 3))                               # (N, C)
    gh = jnp.maximum(gp @ gW1 + gb1[None, :], 0.0)              # (N, Ch)
    g = gh @ gW2 + gb2[None, :]                                 # (N, C)
    # fold the local branch's second bias into the per-batch vector
    g_tot = (g + lb2[None, :])[:, :, None]                      # (N, C, 1)

    # --- kernel operands in flattened-NCHW layout ---
    x_flat = x.reshape(N, C, HW)                                # no transpose
    w1t = lW1.T                                                 # (Ch, C)
    w2t = lW2.T                                                 # (C, Ch)
    b1 = lb1[:, None]                                           # (Ch, 1)
    Ch = w1t.shape[0]

    THW = _pick_hw_tile(HW, hw_tile_cap)
    grid = (N, HW // THW)

    out_flat = pl.pallas_call(
        _msca_kernel,
        out_shape=jax.ShapeDtypeStruct((N, C, HW), jnp.float32),
        grid_spec=pltpu.PrefetchScalarGridSpec(
            num_scalar_prefetch=0,
            grid=grid,
            in_specs=[
                pl.BlockSpec((1, C, THW), lambda n, i: (n, 0, i)),  # x tile
                pl.BlockSpec((Ch, C), lambda n, i: (0, 0)),         # W1e^T
                pl.BlockSpec((Ch, 1), lambda n, i: (0, 0)),         # b1e
                pl.BlockSpec((C, Ch), lambda n, i: (0, 0)),         # W2e^T
                pl.BlockSpec((1, C, 1), lambda n, i: (n, 0, 0)),    # g + b2e (per batch)
            ],
            out_specs=pl.BlockSpec((1, C, THW), lambda n, i: (n, 0, i)),
        ),
        compiler_params=pltpu.CompilerParams(
            dimension_semantics=("parallel", "parallel"),
            vmem_limit_bytes=32 * 1024 * 1024),
    )(x_flat, w1t, b1, w2t, g_tot)

    return out_flat.reshape(N, C, H, W)                         # no transpose


def _ref_forward(x_nchw, params):
    """Pure-JAX reference with identical (eval-mode BN) semantics."""
    N, C, H, W = x_nchw.shape
    x = jnp.transpose(x_nchw, (0, 2, 3, 1)).reshape(N, H * W, C).astype(jnp.float32)
    lW1, lb1 = _fold_bn(params["l_w1"], params["l_b1"], *params["l_bn1"])
    lW2, lb2 = _fold_bn(params["l_w2"], params["l_b2"], *params["l_bn2"])
    gW1, gb1 = _fold_bn(params["g_w1"], params["g_b1"], *params["g_bn1"])
    gW2, gb2 = _fold_bn(params["g_w2"], params["g_b2"], *params["g_bn2"])
    xl = jnp.maximum(x @ lW1 + lb1, 0.0) @ lW2 + lb2
    gp = jnp.mean(x, axis=1)
    g = jnp.maximum(gp @ gW1 + gb1, 0.0) @ gW2 + gb2
    wei = jax.nn.sigmoid(xl + g[:, None, :])
    return jnp.transpose(wei.reshape(N, H, W, C), (0, 3, 1, 2))


def make_params(key, channels=64, r=4):
    out_c = int(channels // r)
    ks = jax.random.split(key, 16)
    f32 = jnp.float32

    def bn(k, n):
        k1, k2, k3, k4 = jax.random.split(k, 4)
        gamma = 1.0 + 0.1 * jax.random.normal(k1, (n,), f32)
        beta = 0.1 * jax.random.normal(k2, (n,), f32)
        mean = 0.1 * jax.random.normal(k3, (n,), f32)
        var = 1.0 + 0.1 * jax.random.uniform(k4, (n,), f32)
        return gamma, beta, mean, var

    # conv weights stored as (in, out) matrices (equivalent to torch (out,in,1,1).T)
    return {
        "l_w1": jax.random.normal(ks[0], (channels, out_c), f32) * 0.1,
        "l_b1": jax.random.normal(ks[1], (out_c,), f32) * 0.1,
        "l_bn1": bn(ks[2], out_c),
        "l_w2": jax.random.normal(ks[3], (out_c, channels), f32) * 0.1,
        "l_b2": jax.random.normal(ks[4], (channels,), f32) * 0.1,
        "l_bn2": bn(ks[5], channels),
        "g_w1": jax.random.normal(ks[6], (channels, out_c), f32) * 0.1,
        "g_b1": jax.random.normal(ks[7], (out_c,), f32) * 0.1,
        "g_bn1": bn(ks[8], out_c),
        "g_w2": jax.random.normal(ks[9], (out_c, channels), f32) * 0.1,
        "g_b2": jax.random.normal(ks[10], (channels,), f32) * 0.1,
        "g_bn2": bn(ks[11], channels),
    }


if __name__ == "__main__":
    key = jax.random.PRNGKey(0)
    k_x, k_p = jax.random.split(key)

    # channels=64, r=4 (module defaults); H=W=32 -> HW=1024; a 512 tile cap
    # exercises the spatial tiling path (grid = (2, 2)).
    N, C, H, W = 2, 64, 32, 32
    x = jax.random.normal(k_x, (N, C, H, W), jnp.float32)
    params = make_params(k_p, channels=C, r=4)

    out = msca_forward(x, params, hw_tile_cap=512)
    out = jax.block_until_ready(out)

    ref = _ref_forward(x, params)
    assert out.shape == (N, C, H, W)
    assert jnp.allclose(out, ref, atol=1e-4, rtol=1e-4), "mismatch vs reference"
    print("KERNEL_OK")
</pallas_src>

<mosaic_0001>
module attributes {stable_mosaic.version = 11 : i64} {
  func.func @_msca_kernel(%arg0: i32, %arg1: i32, %arg2: memref<1x64x512xf32, #tpu.memory_space<vmem>>, %arg3: memref<16x64xf32, #tpu.memory_space<vmem>>, %arg4: memref<16x1xf32, #tpu.memory_space<vmem>>, %arg5: memref<64x16xf32, #tpu.memory_space<vmem>>, %arg6: memref<1x64x1xf32, #tpu.memory_space<vmem>>, %arg7: memref<1x64x512xf32, #tpu.memory_space<vmem>>) attributes {dimension_semantics = [#tpu.dimension_semantics<parallel>, #tpu.dimension_semantics<parallel>], iteration_bounds = array<i64: 2, 2>, scalar_prefetch = 0 : i64, scratch_operands = 0 : i64, tpu.core_type = #tpu.core_type<tc>, window_params = [{transform_indices = @transform_0, window_bounds = array<i64: 1, 64, 512>}, {pipeline_mode = #tpu.pipeline_mode<synchronous>, transform_indices = @transform_1, window_bounds = array<i64: 16, 64>}, {pipeline_mode = #tpu.pipeline_mode<synchronous>, transform_indices = @transform_2, window_bounds = array<i64: 16, 1>}, {pipeline_mode = #tpu.pipeline_mode<synchronous>, transform_indices = @transform_3, window_bounds = array<i64: 64, 16>}, {transform_indices = @transform_4, window_bounds = array<i64: 1, 64, 1>}, {transform_indices = @transform_5, window_bounds = array<i64: 1, 64, 512>}]} {
    %c0 = arith.constant 0 : index
    %c0_0 = arith.constant 0 : index
    %c0_1 = arith.constant 0 : index
    %0 = vector.load %arg2[%c0, %c0_0, %c0_1] : memref<1x64x512xf32, #tpu.memory_space<vmem>>, vector<1x64x512xf32>
    %1 = vector.shape_cast %0 : vector<1x64x512xf32> to vector<64x512xf32>
    %c0_2 = arith.constant 0 : index
    %c0_3 = arith.constant 0 : index
    %2 = vector.load %arg3[%c0_2, %c0_3] : memref<16x64xf32, #tpu.memory_space<vmem>>, vector<16x64xf32>
    %cst = arith.constant dense<0.000000e+00> : vector<16x512xf32>
    %3 = tpu.matmul %2, %1, %cst {dimension_numbers = #tpu.dot_dimension_numbers<[1], [0], [0], [1], [0, 0, 1, 1], [], []>} : vector<16x64xf32>, vector<64x512xf32>, vector<16x512xf32> -> vector<16x512xf32>
    %c0_4 = arith.constant 0 : index
    %c0_5 = arith.constant 0 : index
    %4 = vector.load %arg4[%c0_4, %c0_5] : memref<16x1xf32, #tpu.memory_space<vmem>>, vector<16x1xf32>
    %5 = vector.broadcast %4 : vector<16x1xf32> to vector<16x512xf32>
    %6 = arith.addf %3, %5 : vector<16x512xf32>
    %cst_6 = arith.constant 0.000000e+00 : f32
    %7 = vector.broadcast %cst_6 : f32 to vector<16x512xf32>
    %8 = arith.maximumf %6, %7 : vector<16x512xf32>
    %c0_7 = arith.constant 0 : index
    %c0_8 = arith.constant 0 : index
    %9 = vector.load %arg5[%c0_7, %c0_8] : memref<64x16xf32, #tpu.memory_space<vmem>>, vector<64x16xf32>
    %cst_9 = arith.constant dense<0.000000e+00> : vector<64x512xf32>
    %10 = tpu.matmul %9, %8, %cst_9 {dimension_numbers = #tpu.dot_dimension_numbers<[1], [0], [0], [1], [0, 0, 1, 1], [], []>} : vector<64x16xf32>, vector<16x512xf32>, vector<64x512xf32> -> vector<64x512xf32>
    %c0_10 = arith.constant 0 : index
    %c0_11 = arith.constant 0 : index
    %c0_12 = arith.constant 0 : index
    %11 = vector.load %arg6[%c0_10, %c0_11, %c0_12] : memref<1x64x1xf32, #tpu.memory_space<vmem>>, vector<1x64x1xf32>
    %12 = vector.shape_cast %11 : vector<1x64x1xf32> to vector<64x1xf32>
    %13 = vector.broadcast %12 : vector<64x1xf32> to vector<64x512xf32>
    %14 = arith.addf %10, %13 : vector<64x512xf32>
    %15 = arith.negf %14 : vector<64x512xf32>
    %16 = math.exp %15 : vector<64x512xf32>
    %cst_13 = arith.constant 1.000000e+00 : f32
    %17 = vector.broadcast %cst_13 : f32 to vector<64x512xf32>
    %18 = arith.addf %17, %16 : vector<64x512xf32>
    %19 = arith.divf %17, %18 : vector<64x512xf32>
    %c0_14 = arith.constant 0 : index
    %c0_15 = arith.constant 0 : index
    %c0_16 = arith.constant 0 : index
    %20 = vector.load %arg7[%c0_14, %c0_15, %c0_16] : memref<1x64x512xf32, #tpu.memory_space<vmem>>, vector<1x64x512xf32>
    %21 = vector.shape_cast %20 : vector<1x64x512xf32> to vector<64x512xf32>
    %22 = vector.shape_cast %19 : vector<64x512xf32> to vector<1x64x512xf32>
    tpu.vector_store %arg7[%c0_14, %c0_15, %c0_16], %22 {strides = array<i32>} : memref<1x64x512xf32, #tpu.memory_space<vmem>>, vector<1x64x512xf32>,
    return
  }
  func.func @transform_0(%arg0: i32, %arg1: i32) -> (i32, i32, i32) {
    %c0_i32 = arith.constant 0 : i32
    %c0_i32_0 = arith.constant 0 : i32
    return %arg0, %c0_i32, %arg1 : i32, i32, i32
  }
  func.func @transform_1(%arg0: i32, %arg1: i32) -> (i32, i32) {
    %c0_i32 = arith.constant 0 : i32
    %c0_i32_0 = arith.constant 0 : i32
    %c0_i32_1 = arith.constant 0 : i32
    return %c0_i32, %c0_i32_0 : i32, i32
  }
  func.func @transform_2(%arg0: i32, %arg1: i32) -> (i32, i32) {
    %c0_i32 = arith.constant 0 : i32
    %c0_i32_0 = arith.constant 0 : i32
    %c0_i32_1 = arith.constant 0 : i32
    return %c0_i32, %c0_i32_0 : i32, i32
  }
  func.func @transform_3(%arg0: i32, %arg1: i32) -> (i32, i32) {
    %c0_i32 = arith.constant 0 : i32
    %c0_i32_0 = arith.constant 0 : i32
    %c0_i32_1 = arith.constant 0 : i32
    return %c0_i32, %c0_i32_0 : i32, i32
  }
  func.func @transform_4(%arg0: i32, %arg1: i32) -> (i32, i32, i32) {
    %c0_i32 = arith.constant 0 : i32
    %c0_i32_0 = arith.constant 0 : i32
    %c0_i32_1 = arith.constant 0 : i32
    return %arg0, %c0_i32, %c0_i32_0 : i32, i32, i32
  }
  func.func @transform_5(%arg0: i32, %arg1: i32) -> (i32, i32, i32) {
    %c0_i32 = arith.constant 0 : i32
    %c0_i32_0 = arith.constant 0 : i32
    return %arg0, %c0_i32, %arg1 : i32, i32, i32
  }
}

</mosaic_0001>

<llo_original>
// kernel: tpu_custom_call.1
$region0: #{tpu_custom_call.1}
  #allocation0 [shape = 'u32[]', space=smem, size = 0x4, offset = 0x4, fixed_abs, tag = 'smem constant byte address 0x4 - core index']
  #allocation1 [shape = 'u32[72,128]{1,0:T(1,128)}', space=vmem, size = 0x9000, scoped, tag = 'internal scratch']
  %s0 = inlined_call_operand.hbm [shape: f32[2,64,1024], index: 0, kind: input, shape index: {}]
  %s1 = inlined_call_operand.vmem [shape: f32[16,64], index: 1, kind: input, shape index: {}]
  %s2 = inlined_call_operand.vmem [shape: f32[16,1], index: 2, kind: input, shape index: {}]
  %s3 = inlined_call_operand.vmem [shape: f32[64,16], index: 3, kind: input, shape index: {}]
  %s4 = inlined_call_operand.vmem [shape: f32[2,64,1], index: 4, kind: input, shape index: {}]
  %s5 = inlined_call_operand.hbm [shape: f32[2,64,1024], index: 5, kind: output, shape index: {}]
  %s6 = sld [smem:[#allocation0]]
  $region57: #{tpu_custom_call.1} parent=0
    _
  %s8 = ssub.s32 1, %s6
  %s9 = scalar_select 0, %s8, %s6
  $region1: #{tpu_custom_call.1} parent=0
    #allocation2 [shape = 'u8[262144]{0}', space=vmem, size = 0x40000, scoped, tag = 'input window, operand 0']
    #allocation3 [shape = 's32[2]{0}', space=sflag, size = 0x8, scoped, tag = 'scoped memory for tpu_custom_call.1']
    #allocation4 [shape = 's32[2]{0}', space=sflag, size = 0x8, scoped, tag = 'scoped memory for tpu_custom_call.1']
    #allocation5 [shape = 'u8[262144]{0}', space=vmem, size = 0x40000, scoped, tag = 'output window, operand 0']
    %10 = vsyncpa [#allocation3], 0
    %s11 = scalar_lea.sflag [#allocation3], 1
    %12 = vsyncpa %s11, 0
    %13 = vsyncpa [#allocation4], 0
    %s14 = scalar_lea.sflag [#allocation4], 1
    %15 = vsyncpa %s14, 0
    loop: start=0, step=1, limit=6
    $region2: #{tpu_custom_call.1} parent=1 // loop_pre_header
      _
    $region3: #{tpu_custom_call.1} parent=1 // loop_header
      %s17 = sphi 0, %s21
      %p18 = scmp.ge.s32.totalorder %s17, 6
      %s24 = sphi 0, %s36
      %s25 = sphi 0, %s32
      %s26 = sphi 0, %s24
      %s27 = sphi 0, %s25
      %s28 = sphi 0, %s26
      %s29 = sphi 0, %s27
      %s41 = sphi 0, %s43
      %s44 = sphi 0, %s41
      %s45 = sphi 0, %s44
      %s61 = sphi 0, %s45
      %s65 = sphi 0, %s65
      %s67 = sphi 0, %s65
      %s68 = sphi 0, %s67
      %s82 = sphi 0, %s68
      %s86 = sphi 0, %s86
      %s88 = sphi 0, %s86
      %s89 = sphi 0, %s88
      %s103 = sphi 0, %s89
      %s107 = sphi 0, %s107
      %s109 = sphi 0, %s107
      %s110 = sphi 0, %s109
      %s124 = sphi 0, %s110
      %s130 = sphi 0, %s132
      %s133 = sphi 0, %s130
      %s134 = sphi 0, %s133
      %s150 = sphi 0, %s134
      %s158 = sphi 0, %s160
      %s161 = sphi 0, %s158
      %s162 = sphi 0, %s161
      %s178 = sphi 0, %s162
    $region4: #{tpu_custom_call.1} parent=1 // loop_header_branch
      %20 = sbr.rel (%p18) target = $region8
    $region5: #{tpu_custom_call.1} parent=1 // loop_body
      %s22 = ssub.s32 %s17, 1
      %s23 = ssub.s32 %s17, 2
      %s30 = sadd.s32 1, %s25
      %p31 = scmp.ge.s32.totalorder %s30, 2
      %s32 = scalar_select %p31, 0, %s30
      %s33 = sadd.s32 1, %s24
      %s34 = scalar_select %p31, %s33, %s24
      %p35 = scmp.ge.s32.totalorder %s34, 2
      %s36 = scalar_select %p35, 0, %s34
      %s37 = ssub.s32 %s24, %s36
      %s38 = ssub.s32 %s25, %s32
      %s39 = sor.u32 %s37, %s38
      %p40 = scmp.eq.s32.totalorder %s39, 0
      %s42 = sadd.s32 %s41, 1
      %s43 = scalar_select %p40, %s41, %s42
      %p46 = pneg %p40
      %p47 = scmp.eq.s32.totalorder %s17, 3
      %p48 = por %p46, %p47
      %p49 = scmp.ne.s32.totalorder %s41, %s44
      %p50 = scmp.eq.s32.totalorder %s17, 0
      %p51 = por %p49, %p50
      %p52 = scmp.ne.s32.totalorder %s41, %s44
      %p53 = scmp.eq.s32.totalorder %s22, 3
      %p54 = por %p52, %p53
      %p55 = scmp.ne.s32.totalorder %s44, %s45
      %p56 = scmp.eq.s32.totalorder %s22, 0
      %p57 = por %p55, %p56
      %p58 = scmp.ne.s32.totalorder %s44, %s45
      %p59 = scmp.eq.s32.totalorder %s23, 3
      %p60 = por %p58, %p59
      %p62 = scmp.ne.s32.totalorder %s45, %s61
      %p63 = scmp.eq.s32.totalorder %s23, 0
      %p64 = por %p62, %p63
      %s66 = sadd.s32 %s65, 1
      %p69 = scmp.eq.s32.totalorder %s17, 3
      %p70 = scmp.ne.s32.totalorder %s65, %s67
      %p71 = scmp.eq.s32.totalorder %s17, 0
      %p72 = por %p70, %p71
      %p73 = scmp.ne.s32.totalorder %s65, %s67
      %p74 = scmp.eq.s32.totalorder %s22, 3
      %p75 = por %p73, %p74
      %p76 = scmp.ne.s32.totalorder %s67, %s68
      %p77 = scmp.eq.s32.totalorder %s22, 0
      %p78 = por %p76, %p77
      %p79 = scmp.ne.s32.totalorder %s67, %s68
      %p80 = scmp.eq.s32.totalorder %s23, 3
      %p81 = por %p79, %p80
      %p83 = scmp.ne.s32.totalorder %s68, %s82
      %p84 = scmp.eq.s32.totalorder %s23, 0
      %p85 = por %p83, %p84
      %s87 = sadd.s32 %s86, 1
      %p90 = scmp.eq.s32.totalorder %s17, 3
      %p91 = scmp.ne.s32.totalorder %s86, %s88
      %p92 = scmp.eq.s32.totalorder %s17, 0
      %p93 = por %p91, %p92
      %p94 = scmp.ne.s32.totalorder %s86, %s88
      %p95 = scmp.eq.s32.totalorder %s22, 3
      %p96 = por %p94, %p95
      %p97 = scmp.ne.s32.totalorder %s88, %s89
      %p98 = scmp.eq.s32.totalorder %s22, 0
      %p99 = por %p97, %p98
      %p100 = scmp.ne.s32.totalorder %s88, %s89
      %p101 = scmp.eq.s32.totalorder %s23, 3
      %p102 = por %p100, %p101
      %p104 = scmp.ne.s32.totalorder %s89, %s103
      %p105 = scmp.eq.s32.totalorder %s23, 0
      %p106 = por %p104, %p105
      %s108 = sadd.s32 %s107, 1
      %p111 = scmp.eq.s32.totalorder %s17, 3
      %p112 = scmp.ne.s32.totalorder %s107, %s109
      %p113 = scmp.eq.s32.totalorder %s17, 0
      %p114 = por %p112, %p113
      %p115 = scmp.ne.s32.totalorder %s107, %s109
      %p116 = scmp.eq.s32.totalorder %s22, 3
      %p117 = por %p115, %p116
      %p118 = scmp.ne.s32.totalorder %s109, %s110
      %p119 = scmp.eq.s32.totalorder %s22, 0
      %p120 = por %p118, %p119
      %p121 = scmp.ne.s32.totalorder %s109, %s110
      %p122 = scmp.eq.s32.totalorder %s23, 3
      %p123 = por %p121, %p122
      %p125 = scmp.ne.s32.totalorder %s110, %s124
      %p126 = scmp.eq.s32.totalorder %s23, 0
      %p127 = por %p125, %p126
      %s128 = ssub.s32 %s24, %s36
      %p129 = scmp.eq.s32.totalorder %s128, 0
      %s131 = sadd.s32 %s130, 1
      %s132 = scalar_select %p129, %s130, %s131
      %p135 = pneg %p129
      %p136 = scmp.eq.s32.totalorder %s17, 3
      %p137 = por %p135, %p136
      %p138 = scmp.ne.s32.totalorder %s130, %s133
      %p139 = scmp.eq.s32.totalorder %s17, 0
      %p140 = por %p138, %p139
      %p141 = scmp.ne.s32.totalorder %s130, %s133
      %p142 = scmp.eq.s32.totalorder %s22, 3
      %p143 = por %p141, %p142
      %p144 = scmp.ne.s32.totalorder %s133, %s134
      %p145 = scmp.eq.s32.totalorder %s22, 0
      %p146 = por %p144, %p145
      %p147 = scmp.ne.s32.totalorder %s133, %s134
      %p148 = scmp.eq.s32.totalorder %s23, 3
      %p149 = por %p147, %p148
      %p151 = scmp.ne.s32.totalorder %s134, %s150
      %p152 = scmp.eq.s32.totalorder %s23, 0
      %p153 = por %p151, %p152
      %s154 = ssub.s32 %s24, %s36
      %s155 = ssub.s32 %s25, %s32
      %s156 = sor.u32 %s154, %s155
      %p157 = scmp.eq.s32.totalorder %s156, 0
      %s159 = sadd.s32 %s158, 1
      %s160 = scalar_select %p157, %s158, %s159
      %p163 = pneg %p157
      %p164 = scmp.eq.s32.totalorder %s17, 3
      %p165 = por %p163, %p164
      %p166 = scmp.ne.s32.totalorder %s158, %s161
      %p167 = scmp.eq.s32.totalorder %s17, 0
      %p168 = por %p166, %p167
      %p169 = scmp.ne.s32.totalorder %s158, %s161
      %p170 = scmp.eq.s32.totalorder %s22, 3
      %p171 = por %p169, %p170
      %p172 = scmp.ne.s32.totalorder %s161, %s162
      %p173 = scmp.eq.s32.totalorder %s22, 0
      %p174 = por %p172, %p173
      %p175 = scmp.ne.s32.totalorder %s161, %s162
      %p176 = scmp.eq.s32.totalorder %s23, 3
      %p177 = por %p175, %p176
      %p179 = scmp.ne.s32.totalorder %s162, %s178
      %p180 = scmp.eq.s32.totalorder %s23, 0
      %p181 = por %p179, %p180
      %p182 = scmp.le.s32.totalorder 1, %s17
      %p183 = scmp.lt.s32.totalorder %s17, 5
      %p184 = pnand %p182, %p183
      %p185 = pneg %p184
      // Predicated region
      $region9: #{tpu_custom_call.1} parent=5 // pred_check
        _
      $region10: #{tpu_custom_call.1} parent=5 // pred_check_branch
        %187 = sbr.rel (%p184) target = $region12
      $region11: #{tpu_custom_call.1} parent=5 // pred_region
        %s188 = ssub.s32 %s17, 1
        // Predicated region
        $region13: #{tpu_custom_call.1} parent=11 // pred_check
          %p189 = pneg %p78
        $region14: #{tpu_custom_call.1} parent=11 // pred_check_branch
          %191 = sbr.rel (%p189) target = $region16
        $region15: #{tpu_custom_call.1} parent=11 // pred_region
          _
        $region16: #{tpu_custom_call.1} parent=11 // pred_fallthru
          _
        // Predicated region
        $region17: #{tpu_custom_call.1} parent=11 // pred_check
          %p192 = pneg %p99
        $region18: #{tpu_custom_call.1} parent=11 // pred_check_branch
          %194 = sbr.rel (%p192) target = $region20
        $region19: #{tpu_custom_call.1} parent=11 // pred_region
          _
        $region20: #{tpu_custom_call.1} parent=11 // pred_fallthru
          _
        // Predicated region
        $region21: #{tpu_custom_call.1} parent=11 // pred_check
          %p195 = pneg %p120
        $region22: #{tpu_custom_call.1} parent=11 // pred_check_branch
          %197 = sbr.rel (%p195) target = $region24
        $region23: #{tpu_custom_call.1} parent=11 // pred_region
          _
        $region24: #{tpu_custom_call.1} parent=11 // pred_fallthru
          _
      $region12: #{tpu_custom_call.1} parent=5 // pred_fallthru
        _
      %p198 = scmp.lt.s32.totalorder %s17, 4
      // Predicated region
      $region25: #{tpu_custom_call.1} parent=5 // pred_check
        %p199 = pneg %p198
      $region26: #{tpu_custom_call.1} parent=5 // pred_check_branch
        %201 = sbr.rel (%p199) target = $region28
      $region27: #{tpu_custom_call.1} parent=5 // pred_region
        // Predicated region
        $region29: #{tpu_custom_call.1} parent=27 // pred_check
          %p202 = pneg %p51
        $region30: #{tpu_custom_call.1} parent=27 // pred_check_branch
          %204 = sbr.rel (%p202) target = $region32
        $region31: #{tpu_custom_call.1} parent=27 // pred_region
          %s205 = sand.u32 %s41, 1
          %s206 = scalar_lea.sflag [#allocation3], %s205
          %s207 = sand.u32 %s41, 1
          %s208 = smul.addr %s207, 256
          %s209 = scalar_lea.vmem [#allocation2], %s208
          %s210 = smul.u32 4, %s25
          %212 = vsyncadd %s206, 0
          %s213 = smul.addr %s24, 64
          %s214 = sadd.s32 %s210, %s213
          %s215 = smul.addr %s214, 8
          %s216 = scalar_lea.hbm %s0, %s215
          %s217 = sshll.u32 %s216, 4
          %s218 = int_to_ptr.hbm [resolvable:$true] %s217
          %s219 = sshll.u32 %s209, 4
          %s220 = int_to_ptr.vmem [resolvable:$true] %s219
          %225 = dma.hbm_to_vmem [thread:$0]  %s218, 4096, %s220, %s206, 1024, 512, 32
        $region32: #{tpu_custom_call.1} parent=27 // pred_fallthru
          _
        // Predicated region
        $region33: #{tpu_custom_call.1} parent=27 // pred_check
          %p226 = pneg %p140
        $region34: #{tpu_custom_call.1} parent=27 // pred_check_branch
          %228 = sbr.rel (%p226) target = $region36
        $region35: #{tpu_custom_call.1} parent=27 // pred_region
          %p229 = scmp.lt.s32.totalorder %s24, 1
          %s230 = scalar_select %p229, %s24, 1
          %s231 = smul.addr %s230, 8
          %s232 = smul.addr %s231, 8
          %s233 = scalar_lea.vmem %s4, %s232
        $region36: #{tpu_custom_call.1} parent=27 // pred_fallthru
          _
      $region28: #{tpu_custom_call.1} parent=5 // pred_fallthru
        _
      %p234 = scmp.le.s32.totalorder 1, %s17
      %p235 = scmp.lt.s32.totalorder %s17, 5
      %p236 = pnand %p234, %p235
      %p237 = pneg %p236
      // Predicated region
      $region37: #{tpu_custom_call.1} parent=5 // pred_check
        _
      $region38: #{tpu_custom_call.1} parent=5 // pred_check_branch
        %239 = sbr.rel (%p236) target = $region40
      $region39: #{tpu_custom_call.1} parent=5 // pred_region
        %s240 = ssub.s32 %s17, 1
        %s241 = sand.u32 %s44, 1
        %s242 = scalar_lea.sflag [#allocation3], %s241
        %s243 = sand.u32 %s44, 1
        %s244 = smul.addr %s243, 256
        %s245 = scalar_lea.vmem [#allocation2], %s244
        // Predicated region
        $region41: #{tpu_custom_call.1} parent=39 // pred_check
          %p246 = pneg %p57
        $region42: #{tpu_custom_call.1} parent=39 // pred_check_branch
          %248 = sbr.rel (%p246) target = $region44
        $region43: #{tpu_custom_call.1} parent=39 // pred_region
          %250 = dma.done %s242, 4096
        $region44: #{tpu_custom_call.1} parent=39 // pred_fallthru
          _
        %s251 = sand.u32 %s44, 1
        %s252 = scalar_lea.sflag [#allocation3], %s251
        %s253 = sand.u32 %s44, 1
        %s254 = smul.addr %s253, 256
        %s255 = scalar_lea.vmem [#allocation2], %s254
        %p256 = pneg %p57
        %p257 = pneg %p54
        %p258 = pneg %p78
        %p259 = pneg %p75
        %p260 = pneg %p99
        %p261 = pneg %p96
        %p262 = pneg %p120
        %p263 = pneg %p117
        %p264 = scmp.lt.s32.totalorder %s26, 1
        %s265 = scalar_select %p264, %s26, 1
        %s266 = smul.addr %s265, 8
        %s267 = smul.addr %s266, 8
        %s268 = scalar_lea.vmem %s4, %s267
        %p269 = pneg %p146
        %p270 = pneg %p143
        %p271 = pneg %p174
        %p272 = pneg %p171
        %s273 = sand.u32 %s161, 1
        %s274 = scalar_lea.sflag [#allocation4], %s273
        %s275 = sand.u32 %s161, 1
        %s276 = smul.addr %s275, 256
        %s277 = scalar_lea.vmem [#allocation5], %s276
        %s278 = smul.u32 4, %s27
        %p279 = scmp.lt.s32.totalorder %s26, 1
        %s280 = scalar_select %p279, %s26, 1
        %s281 = smul.addr %s280, 8
        %s282 = smul.addr %s281, 8
        %s283 = scalar_lea.vmem %s4, %s282
        %s284 = smul.u32 4, %s27
        %v285 = vld [vmem:[%s245] sm:$0xff]
        %v286 = vld [vmem:[%s245 + $0x8] sm:$0xff]
        %v287 = vld [vmem:[%s245 + $0x10] sm:$0xff]
        %v288 = vld [vmem:[%s245 + $0x18] sm:$0xff]
        %v289 = vld [vmem:[%s245 + $0x20] sm:$0xff]
        %v290 = vld [vmem:[%s245 + $0x28] sm:$0xff]
        %v291 = vld [vmem:[%s245 + $0x30] sm:$0xff]
        %v292 = vld [vmem:[%s245 + $0x38] sm:$0xff]
        %v293 = vld [vmem:[%s245 + $0x40] sm:$0xff]
        %v294 = vld [vmem:[%s245 + $0x48] sm:$0xff]
        %v295 = vld [vmem:[%s245 + $0x50] sm:$0xff]
        %v296 = vld [vmem:[%s245 + $0x58] sm:$0xff]
        %v297 = vld [vmem:[%s245 + $0x60] sm:$0xff]
        %v298 = vld [vmem:[%s245 + $0x68] sm:$0xff]
        %v299 = vld [vmem:[%s245 + $0x70] sm:$0xff]
        %v300 = vld [vmem:[%s245 + $0x78] sm:$0xff]
        %v301 = vld [vmem:[%s245 + $0x80] sm:$0xff]
        %v302 = vld [vmem:[%s245 + $0x88] sm:$0xff]
        %v303 = vld [vmem:[%s245 + $0x90] sm:$0xff]
        %v304 = vld [vmem:[%s245 + $0x98] sm:$0xff]
        %v305 = vld [vmem:[%s245 + $0xa0] sm:$0xff]
        %v306 = vld [vmem:[%s245 + $0xa8] sm:$0xff]
        %v307 = vld [vmem:[%s245 + $0xb0] sm:$0xff]
        %v308 = vld [vmem:[%s245 + $0xb8] sm:$0xff]
        %v309 = vld [vmem:[%s245 + $0xc0] sm:$0xff]
        %v310 = vld [vmem:[%s245 + $0xc8] sm:$0xff]
        %v311 = vld [vmem:[%s245 + $0xd0] sm:$0xff]
        %v312 = vld [vmem:[%s245 + $0xd8] sm:$0xff]
        %v313 = vld [vmem:[%s245 + $0xe0] sm:$0xff]
        %v314 = vld [vmem:[%s245 + $0xe8] sm:$0xff]
        %v315 = vld [vmem:[%s245 + $0xf0] sm:$0xff]
        %v316 = vld [vmem:[%s245 + $0xf8] sm:$0xff]
        %v317 = vld [vmem:[%s1] sm:$0xff]
        %v318 = vld [vmem:[%s1 + $0x8] sm:$0xff]
        %v319 = vld [vmem:[%s2] sm:$0xff]
        %v320 = vld [vmem:[%s2 + $0x8] sm:$0xff]
        %322 = vset.pattern.permute.xlu0 0
        %323 = vperm.xlu0 %322, %v319
        %v324 = vpop.permute.xlu0 %323
        %327 = vset.pattern.permute.xlu0 0
        %328 = vperm.xlu0 %327, %v320
        %v329 = vpop.permute.xlu0 %328
        %vm331 = vcmask 523264
        %v333 = vsel %vm331, %v317, 0
        %v336 = vsel %vm331, %v318, 0
        %338 = vmatpush.msra.mxu0 0.0
        %339 = vmatpush.msra.mxu0 0.0
        %340 = vmatpush.msra.mxu0 0.0
        %341 = vmatpush.msra.mxu0 0.0
        %342 = vmatpush.msra.mxu0 0.0
        %343 = vmatpush.msra.mxu0 0.0
        %344 = vmatpush.msra.mxu0 0.0
        %345 = vmatpush.msra.mxu0 0.0
        %346 = vmatpush.msra.mxu0 %v313
        %347 = vmatpush.msra.mxu0 %v309
        %348 = vmatpush.msra.mxu0 %v305
        %349 = vmatpush.msra.mxu0 %v301
        %350 = vmatpush.msra.mxu0 %v297
        %351 = vmatpush.msra.mxu0 %v293
        %352 = vmatpush.msra.mxu0 %v289
        %353 = vmatpush.msra.mxu0 %v285
        %354 = vmatmul.f32.gmra.mxu0 %v333
        %v355 = vpop.f32.mrf.mxu0
        %v356 = vadd.f32 %v324, %v355
        %357 = vmatmul.f32.gmra.mxu0 %v336
        %v358 = vpop.f32.mrf.mxu0
        %v359 = vadd.f32 %v329, %v358
        %360 = vdwg.mxu0
        %361 = vmatpush.msra.mxu0 0.0
        %362 = vmatpush.msra.mxu0 0.0
        %363 = vmatpush.msra.mxu0 0.0
        %364 = vmatpush.msra.mxu0 0.0
        %365 = vmatpush.msra.mxu0 0.0
        %366 = vmatpush.msra.mxu0 0.0
        %367 = vmatpush.msra.mxu0 0.0
        %368 = vmatpush.msra.mxu0 0.0
        %369 = vmatpush.msra.mxu0 %v314
        %370 = vmatpush.msra.mxu0 %v310
        %371 = vmatpush.msra.mxu0 %v306
        %372 = vmatpush.msra.mxu0 %v302
        %373 = vmatpush.msra.mxu0 %v298
        %374 = vmatpush.msra.mxu0 %v294
        %375 = vmatpush.msra.mxu0 %v290
        %376 = vmatpush.msra.mxu0 %v286
        %377 = vmatmul.f32.gmra.mxu0 %v333
        %v378 = vpop.f32.mrf.mxu0
        %v379 = vadd.f32 %v324, %v378
        %380 = vmatmul.f32.gmra.mxu0 %v336
        %v381 = vpop.f32.mrf.mxu0
        %v382 = vadd.f32 %v329, %v381
        %383 = vdwg.mxu0
        %384 = vmatpush.msra.mxu0 0.0
        %385 = vmatpush.msra.mxu0 0.0
        %386 = vmatpush.msra.mxu0 0.0
        %387 = vmatpush.msra.mxu0 0.0
        %388 = vmatpush.msra.mxu0 0.0
        %389 = vmatpush.msra.mxu0 0.0
        %390 = vmatpush.msra.mxu0 0.0
        %391 = vmatpush.msra.mxu0 0.0
        %392 = vmatpush.msra.mxu0 %v315
        %393 = vmatpush.msra.mxu0 %v311
        %394 = vmatpush.msra.mxu0 %v307
        %395 = vmatpush.msra.mxu0 %v303
        %396 = vmatpush.msra.mxu0 %v299
        %397 = vmatpush.msra.mxu0 %v295
        %398 = vmatpush.msra.mxu0 %v291
        %399 = vmatpush.msra.mxu0 %v287
        %400 = vmatmul.f32.gmra.mxu0 %v333
        %v401 = vpop.f32.mrf.mxu0
        %v402 = vadd.f32 %v324, %v401
        %403 = vmatmul.f32.gmra.mxu0 %v336
        %v404 = vpop.f32.mrf.mxu0
        %v405 = vadd.f32 %v329, %v404
        %406 = vdwg.mxu0
        %407 = vmatpush.msra.mxu0 0.0
        %408 = vmatpush.msra.mxu0 0.0
        %409 = vmatpush.msra.mxu0 0.0
        %410 = vmatpush.msra.mxu0 0.0
        %411 = vmatpush.msra.mxu0 0.0
        %412 = vmatpush.msra.mxu0 0.0
        %413 = vmatpush.msra.mxu0 0.0
        %414 = vmatpush.msra.mxu0 0.0
        %415 = vmatpush.msra.mxu0 %v316
        %416 = vmatpush.msra.mxu0 %v312
        %417 = vmatpush.msra.mxu0 %v308
        %418 = vmatpush.msra.mxu0 %v304
        %419 = vmatpush.msra.mxu0 %v300
        %420 = vmatpush.msra.mxu0 %v296
        %421 = vmatpush.msra.mxu0 %v292
        %422 = vmatpush.msra.mxu0 %v288
        %423 = vmatmul.f32.gmra.mxu0 %v333
        %v424 = vpop.f32.mrf.mxu0
        %v425 = vadd.f32 %v324, %v424
        %426 = vmatmul.f32.gmra.mxu0 %v336
        %v427 = vpop.f32.mrf.mxu0
        %v428 = vadd.f32 %v329, %v427
        %429 = vdwg.mxu0
        %v430 = vmax.f32 %v356, 0.0
        %v431 = vmax.f32 %v379, 0.0
        %v432 = vmax.f32 %v402, 0.0
        %v433 = vmax.f32 %v425, 0.0
        %v434 = vmax.f32 %v359, 0.0
        %v435 = vmax.f32 %v382, 0.0
        %v436 = vmax.f32 %v405, 0.0
        %v437 = vmax.f32 %v428, 0.0
        %v438 = vld [vmem:[%s3] sm:$0xff]
        %v439 = vld [vmem:[%s3 + $0x8] sm:$0xff]
        %v440 = vld [vmem:[%s3 + $0x10] sm:$0xff]
        %v441 = vld [vmem:[%s3 + $0x18] sm:$0xff]
        %v442 = vld [vmem:[%s3 + $0x20] sm:$0xff]
        %v443 = vld [vmem:[%s3 + $0x28] sm:$0xff]
        %v444 = vld [vmem:[%s3 + $0x30] sm:$0xff]
        %v445 = vld [vmem:[%s3 + $0x38] sm:$0xff]
        %v446 = vld [vmem:[%s283] sm:$0xff]
        %v447 = vld [vmem:[%s283 + $0x8] sm:$0xff]
        %v448 = vld [vmem:[%s283 + $0x10] sm:$0xff]
        %v449 = vld [vmem:[%s283 + $0x18] sm:$0xff]
        %v450 = vld [vmem:[%s283 + $0x20] sm:$0xff]
        %v451 = vld [vmem:[%s283 + $0x28] sm:$0xff]
        %v452 = vld [vmem:[%s283 + $0x30] sm:$0xff]
        %v453 = vld [vmem:[%s283 + $0x38] sm:$0xff]
        %455 = vset.pattern.permute.xlu0 0
        %456 = vperm.xlu0 %455, %v446
        %v457 = vpop.permute.xlu0 %456
        %460 = vset.pattern.permute.xlu0 0
        %461 = vperm.xlu0 %460, %v447
        %v462 = vpop.permute.xlu0 %461
        %465 = vset.pattern.permute.xlu0 0
        %466 = vperm.xlu0 %465, %v448
        %v467 = vpop.permute.xlu0 %466
        %470 = vset.pattern.permute.xlu0 0
        %471 = vperm.xlu0 %470, %v449
        %v472 = vpop.permute.xlu0 %471
        %475 = vset.pattern.permute.xlu0 0
        %476 = vperm.xlu0 %475, %v450
        %v477 = vpop.permute.xlu0 %476
        %480 = vset.pattern.permute.xlu0 0
        %481 = vperm.xlu0 %480, %v451
        %v482 = vpop.permute.xlu0 %481
        %485 = vset.pattern.permute.xlu0 0
        %486 = vperm.xlu0 %485, %v452
        %v487 = vpop.permute.xlu0 %486
        %490 = vset.pattern.permute.xlu0 0
        %491 = vperm.xlu0 %490, %v453
        %v492 = vpop.permute.xlu0 %491
        %vm494 = vcmask 130048
        %v496 = vsel %vm494, %v438, 0
        %v499 = vsel %vm494, %v439, 0
        %v502 = vsel %vm494, %v440, 0
        %v505 = vsel %vm494, %v441, 0
        %v508 = vsel %vm494, %v442, 0
        %v511 = vsel %vm494, %v443, 0
        %v514 = vsel %vm494, %v444, 0
        %v517 = vsel %vm494, %v445, 0
        %519 = vmatpush.msra.mxu0 0.0
        %520 = vmatpush.msra.mxu0 0.0
        %521 = vmatpush.msra.mxu0 0.0
        %522 = vmatpush.msra.mxu0 0.0
        %523 = vmatpush.msra.mxu0 0.0
        %524 = vmatpush.msra.mxu0 0.0
        %525 = vmatpush.msra.mxu0 0.0
        %526 = vmatpush.msra.mxu0 0.0
        %527 = vmatpush.msra.mxu0 0.0
        %528 = vmatpush.msra.mxu0 0.0
        %529 = vmatpush.msra.mxu0 0.0
        %530 = vmatpush.msra.mxu0 0.0
        %531 = vmatpush.msra.mxu0 0.0
        %532 = vmatpush.msra.mxu0 0.0
        %533 = vmatpush.msra.mxu0 %v434
        %534 = vmatpush.msra.mxu0 %v430
        %535 = vmatmul.f32.gmra.mxu0 %v496
        %v536 = vpop.f32.mrf.mxu0
        %v537 = vadd.f32 %v457, %v536
        %538 = vmatmul.f32.gmra.mxu0 %v499
        %v539 = vpop.f32.mrf.mxu0
        %v540 = vadd.f32 %v462, %v539
        %541 = vmatmul.f32.gmra.mxu0 %v502
        %v542 = vpop.f32.mrf.mxu0
        %v543 = vadd.f32 %v467, %v542
        %544 = vmatmul.f32.gmra.mxu0 %v505
        %v545 = vpop.f32.mrf.mxu0
        %v546 = vadd.f32 %v472, %v545
        %547 = vmatmul.f32.gmra.mxu0 %v508
        %v548 = vpop.f32.mrf.mxu0
        %v549 = vadd.f32 %v477, %v548
        %550 = vmatmul.f32.gmra.mxu0 %v511
        %v551 = vpop.f32.mrf.mxu0
        %v552 = vadd.f32 %v482, %v551
        %553 = vmatmul.f32.gmra.mxu0 %v514
        %v554 = vpop.f32.mrf.mxu0
        %v555 = vadd.f32 %v487, %v554
        %556 = vmatmul.f32.gmra.mxu0 %v517
        %v557 = vpop.f32.mrf.mxu0
        %v558 = vadd.f32 %v492, %v557
        %559 = vdwg.mxu0
        %560 = vmatpush.msra.mxu0 0.0
        %561 = vmatpush.msra.mxu0 0.0
        %562 = vmatpush.msra.mxu0 0.0
        %563 = vmatpush.msra.mxu0 0.0
        %564 = vmatpush.msra.mxu0 0.0
        %565 = vmatpush.msra.mxu0 0.0
        %566 = vmatpush.msra.mxu0 0.0
        %567 = vmatpush.msra.mxu0 0.0
        %568 = vmatpush.msra.mxu0 0.0
        %569 = vmatpush.msra.mxu0 0.0
        %570 = vmatpush.msra.mxu0 0.0
        %571 = vmatpush.msra.mxu0 0.0
        %572 = vmatpush.msra.mxu0 0.0
        %573 = vmatpush.msra.mxu0 0.0
        %574 = vmatpush.msra.mxu0 %v435
        %575 = vmatpush.msra.mxu0 %v431
        %576 = vmatmul.f32.gmra.mxu0 %v496
        %v577 = vpop.f32.mrf.mxu0
        %v578 = vadd.f32 %v457, %v577
        %579 = vmatmul.f32.gmra.mxu0 %v499
        %v580 = vpop.f32.mrf.mxu0
        %v581 = vadd.f32 %v462, %v580
        %582 = vmatmul.f32.gmra.mxu0 %v502
        %v583 = vpop.f32.mrf.mxu0
        %v584 = vadd.f32 %v467, %v583
        %585 = vmatmul.f32.gmra.mxu0 %v505
        %v586 = vpop.f32.mrf.mxu0
        %v587 = vadd.f32 %v472, %v586
        %588 = vmatmul.f32.gmra.mxu0 %v508
        %v589 = vpop.f32.mrf.mxu0
        %v590 = vadd.f32 %v477, %v589
        %591 = vmatmul.f32.gmra.mxu0 %v511
        %v592 = vpop.f32.mrf.mxu0
        %v593 = vadd.f32 %v482, %v592
        %594 = vmatmul.f32.gmra.mxu0 %v514
        %v595 = vpop.f32.mrf.mxu0
        %v596 = vadd.f32 %v487, %v595
        %597 = vmatmul.f32.gmra.mxu0 %v517
        %v598 = vpop.f32.mrf.mxu0
        %v599 = vadd.f32 %v492, %v598
        %600 = vdwg.mxu0
        %601 = vmatpush.msra.mxu0 0.0
        %602 = vmatpush.msra.mxu0 0.0
        %603 = vmatpush.msra.mxu0 0.0
        %604 = vmatpush.msra.mxu0 0.0
        %605 = vmatpush.msra.mxu0 0.0
        %606 = vmatpush.msra.mxu0 0.0
        %607 = vmatpush.msra.mxu0 0.0
        %608 = vmatpush.msra.mxu0 0.0
        %609 = vmatpush.msra.mxu0 0.0
        %610 = vmatpush.msra.mxu0 0.0
        %611 = vmatpush.msra.mxu0 0.0
        %612 = vmatpush.msra.mxu0 0.0
        %613 = vmatpush.msra.mxu0 0.0
        %614 = vmatpush.msra.mxu0 0.0
        %615 = vmatpush.msra.mxu0 %v436
        %616 = vmatpush.msra.mxu0 %v432
        %617 = vmatmul.f32.gmra.mxu0 %v496
        %v618 = vpop.f32.mrf.mxu0
        %v619 = vadd.f32 %v457, %v618
        %620 = vmatmul.f32.gmra.mxu0 %v499
        %v621 = vpop.f32.mrf.mxu0
        %v622 = vadd.f32 %v462, %v621
        %623 = vmatmul.f32.gmra.mxu0 %v502
        %v624 = vpop.f32.mrf.mxu0
        %v625 = vadd.f32 %v467, %v624
        %626 = vmatmul.f32.gmra.mxu0 %v505
        %v627 = vpop.f32.mrf.mxu0
        %v628 = vadd.f32 %v472, %v627
        %629 = vmatmul.f32.gmra.mxu0 %v508
        %v630 = vpop.f32.mrf.mxu0
        %v631 = vadd.f32 %v477, %v630
        %632 = vmatmul.f32.gmra.mxu0 %v511
        %v633 = vpop.f32.mrf.mxu0
        %v634 = vadd.f32 %v482, %v633
        %635 = vmatmul.f32.gmra.mxu0 %v514
        %v636 = vpop.f32.mrf.mxu0
        %v637 = vadd.f32 %v487, %v636
        %638 = vmatmul.f32.gmra.mxu0 %v517
        %v639 = vpop.f32.mrf.mxu0
        %v640 = vadd.f32 %v492, %v639
        %641 = vdwg.mxu0
        %642 = vmatpush.msra.mxu0 0.0
        %643 = vmatpush.msra.mxu0 0.0
        %644 = vmatpush.msra.mxu0 0.0
        %645 = vmatpush.msra.mxu0 0.0
        %646 = vmatpush.msra.mxu0 0.0
        %647 = vmatpush.msra.mxu0 0.0
        %648 = vmatpush.msra.mxu0 0.0
        %649 = vmatpush.msra.mxu0 0.0
        %650 = vmatpush.msra.mxu0 0.0
        %651 = vmatpush.msra.mxu0 0.0
        %652 = vmatpush.msra.mxu0 0.0
        %653 = vmatpush.msra.mxu0 0.0
        %654 = vmatpush.msra.mxu0 0.0
        %655 = vmatpush.msra.mxu0 0.0
        %656 = vmatpush.msra.mxu0 %v437
        %657 = vmatpush.msra.mxu0 %v433
        %658 = vmatmul.f32.gmra.mxu0 %v496
        %v659 = vpop.f32.mrf.mxu0
        %v660 = vadd.f32 %v457, %v659
        %661 = vmatmul.f32.gmra.mxu0 %v499
        %v662 = vpop.f32.mrf.mxu0
        %v663 = vadd.f32 %v462, %v662
        %664 = vmatmul.f32.gmra.mxu0 %v502
        %v665 = vpop.f32.mrf.mxu0
        %v666 = vadd.f32 %v467, %v665
        %667 = vmatmul.f32.gmra.mxu0 %v505
        %v668 = vpop.f32.mrf.mxu0
        %v669 = vadd.f32 %v472, %v668
        %670 = vmatmul.f32.gmra.mxu0 %v508
        %v671 = vpop.f32.mrf.mxu0
        %v672 = vadd.f32 %v477, %v671
        %673 = vmatmul.f32.gmra.mxu0 %v511
        %v674 = vpop.f32.mrf.mxu0
        %v675 = vadd.f32 %v482, %v674
        %676 = vmatmul.f32.gmra.mxu0 %v514
        %v677 = vpop.f32.mrf.mxu0
        %v678 = vadd.f32 %v487, %v677
        %679 = vmatmul.f32.gmra.mxu0 %v517
        %v680 = vpop.f32.mrf.mxu0
        %v681 = vadd.f32 %v492, %v680
        %682 = vdwg.mxu0
        %v683 = vxor.u32 %v537, 2147483648
        %v684 = vxor.u32 %v578, 2147483648
        %v685 = vxor.u32 %v619, 2147483648
        %v686 = vxor.u32 %v660, 2147483648
        %v687 = vxor.u32 %v540, 2147483648
        %v688 = vxor.u32 %v581, 2147483648
        %v689 = vxor.u32 %v622, 2147483648
        %v690 = vxor.u32 %v663, 2147483648
        %v691 = vxor.u32 %v543, 2147483648
        %v692 = vxor.u32 %v584, 2147483648
        %v693 = vxor.u32 %v625, 2147483648
        %v694 = vxor.u32 %v666, 2147483648
        %v695 = vxor.u32 %v546, 2147483648
        %v696 = vxor.u32 %v587, 2147483648
        %v697 = vxor.u32 %v628, 2147483648
        %v698 = vxor.u32 %v669, 2147483648
        %v699 = vxor.u32 %v549, 2147483648
        %v700 = vxor.u32 %v590, 2147483648
        %v701 = vxor.u32 %v631, 2147483648
        %v702 = vxor.u32 %v672, 2147483648
        %v703 = vxor.u32 %v552, 2147483648
        %v704 = vxor.u32 %v593, 2147483648
        %v705 = vxor.u32 %v634, 2147483648
        %v706 = vxor.u32 %v675, 2147483648
        %v707 = vxor.u32 %v555, 2147483648
        %v708 = vxor.u32 %v596, 2147483648
        %v709 = vxor.u32 %v637, 2147483648
        %v710 = vxor.u32 %v678, 2147483648
        %v711 = vxor.u32 %v558, 2147483648
        %v712 = vxor.u32 %v599, 2147483648
        %v713 = vxor.u32 %v640, 2147483648
        %v714 = vxor.u32 %v681, 2147483648
        %v715 = vmul.f32 %v683, 1.442695
        %v716 = vpow.pop %v715
        %v717 = vmul.f32 %v684, 1.442695
        %v718 = vpow.pop %v717
        %v719 = vmul.f32 %v685, 1.442695
        %v720 = vpow.pop %v719
        %v721 = vmul.f32 %v686, 1.442695
        %v722 = vpow.pop %v721
        %v723 = vmul.f32 %v687, 1.442695
        %v724 = vpow.pop %v723
        %v725 = vmul.f32 %v688, 1.442695
        %v726 = vpow.pop %v725
        %v727 = vmul.f32 %v689, 1.442695
        %v728 = vpow.pop %v727
        %v729 = vmul.f32 %v690, 1.442695
        %v730 = vpow.pop %v729
        %v731 = vmul.f32 %v691, 1.442695
        %v732 = vpow.pop %v731
        %v733 = vmul.f32 %v692, 1.442695
        %v734 = vpow.pop %v733
        %v735 = vmul.f32 %v693, 1.442695
        %v736 = vpow.pop %v735
        %v737 = vmul.f32 %v694, 1.442695
        %v738 = vpow.pop %v737
        %v739 = vmul.f32 %v695, 1.442695
        %v740 = vpow.pop %v739
        %v741 = vmul.f32 %v696, 1.442695
        %v742 = vpow.pop %v741
        %v743 = vmul.f32 %v697, 1.442695
        %v744 = vpow.pop %v743
        %v745 = vmul.f32 %v698, 1.442695
        %v746 = vpow.pop %v745
        %v747 = vmul.f32 %v699, 1.442695
        %v748 = vpow.pop %v747
        %v749 = vmul.f32 %v700, 1.442695
        %v750 = vpow.pop %v749
        %v751 = vmul.f32 %v701, 1.442695
        %v752 = vpow.pop %v751
        %v753 = vmul.f32 %v702, 1.442695
        %v754 = vpow.pop %v753
        %v755 = vmul.f32 %v703, 1.442695
        %v756 = vpow.pop %v755
        %v757 = vmul.f32 %v704, 1.442695
        %v758 = vpow.pop %v757
        %v759 = vmul.f32 %v705, 1.442695
        %v760 = vpow.pop %v759
        %v761 = vmul.f32 %v706, 1.442695
        %v762 = vpow.pop %v761
        %v763 = vmul.f32 %v707, 1.442695
        %v764 = vpow.pop %v763
        %v765 = vmul.f32 %v708, 1.442695
        %v766 = vpow.pop %v765
        %v767 = vmul.f32 %v709, 1.442695
        %v768 = vpow.pop %v767
        %v769 = vmul.f32 %v710, 1.442695
        %v770 = vpow.pop %v769
        %v771 = vmul.f32 %v711, 1.442695
        %v772 = vpow.pop %v771
        %v773 = vmul.f32 %v712, 1.442695
        %v774 = vpow.pop %v773
        %v775 = vmul.f32 %v713, 1.442695
        %v776 = vpow.pop %v775
        %v777 = vmul.f32 %v714, 1.442695
        %v778 = vpow.pop %v777
        %v779 = vadd.f32 %v716, 1.0
        %v780 = vadd.f32 %v718, 1.0
        %v781 = vadd.f32 %v720, 1.0
        %v782 = vadd.f32 %v722, 1.0
        %v783 = vadd.f32 %v724, 1.0
        %v784 = vadd.f32 %v726, 1.0
        %v785 = vadd.f32 %v728, 1.0
        %v786 = vadd.f32 %v730, 1.0
        %v787 = vadd.f32 %v732, 1.0
        %v788 = vadd.f32 %v734, 1.0
        %v789 = vadd.f32 %v736, 1.0
        %v790 = vadd.f32 %v738, 1.0
        %v791 = vadd.f32 %v740, 1.0
        %v792 = vadd.f32 %v742, 1.0
        %v793 = vadd.f32 %v744, 1.0
        %v794 = vadd.f32 %v746, 1.0
        %v795 = vadd.f32 %v748, 1.0
        %v796 = vadd.f32 %v750, 1.0
        %v797 = vadd.f32 %v752, 1.0
        %v798 = vadd.f32 %v754, 1.0
        %v799 = vadd.f32 %v756, 1.0
        %v800 = vadd.f32 %v758, 1.0
        %v801 = vadd.f32 %v760, 1.0
        %v802 = vadd.f32 %v762, 1.0
        %v803 = vadd.f32 %v764, 1.0
        %v804 = vadd.f32 %v766, 1.0
        %v805 = vadd.f32 %v768, 1.0
        %v806 = vadd.f32 %v770, 1.0
        %v807 = vadd.f32 %v772, 1.0
        %v808 = vadd.f32 %v774, 1.0
        %v809 = vadd.f32 %v776, 1.0
        %v810 = vadd.f32 %v778, 1.0
        %v811 = vrcp.pop %v779
        %v812 = vmul.f32 %v779, %v811
        %v813 = vsub.f32 1.0, %v812
        %v814 = vmul.f32 %v811, %v813
        %v815 = vadd.f32 %v811, %v814
        %vm816 = vweird.f32 %v779
        %vm817 = vweird.f32 %v811
        %vm818 = vmor %vm816, %vm817
        %v819 = vsel %vm818, %v811, %v815
        %v820 = vand.u32 2147483647, %v779
        %vm821 = vcmp.eq.f32.partialorder %v820, 8.507059e+37
        %v822 = vand.u32 %v779, 2147483648
        %v823 = vor.u32 1.1754944e-38, %v822
        %v824 = vsel %vm821, %v823, %v819
        %v825 = vmul.f32 1.0, %v824
        %v826 = vrcp.pop %v780
        %v827 = vmul.f32 %v780, %v826
        %v828 = vsub.f32 1.0, %v827
        %v829 = vmul.f32 %v826, %v828
        %v830 = vadd.f32 %v826, %v829
        %vm831 = vweird.f32 %v780
        %vm832 = vweird.f32 %v826
        %vm833 = vmor %vm831, %vm832
        %v834 = vsel %vm833, %v826, %v830
        %v835 = vand.u32 2147483647, %v780
        %vm836 = vcmp.eq.f32.partialorder %v835, 8.507059e+37
        %v837 = vand.u32 %v780, 2147483648
        %v838 = vor.u32 1.1754944e-38, %v837
        %v839 = vsel %vm836, %v838, %v834
        %v840 = vmul.f32 1.0, %v839
        %v841 = vrcp.pop %v781
        %v842 = vmul.f32 %v781, %v841
        %v843 = vsub.f32 1.0, %v842
        %v844 = vmul.f32 %v841, %v843
        %v845 = vadd.f32 %v841, %v844
        %vm846 = vweird.f32 %v781
        %vm847 = vweird.f32 %v841
        %vm848 = vmor %vm846, %vm847
        %v849 = vsel %vm848, %v841, %v845
        %v850 = vand.u32 2147483647, %v781
        %vm851 = vcmp.eq.f32.partialorder %v850, 8.507059e+37
        %v852 = vand.u32 %v781, 2147483648
        %v853 = vor.u32 1.1754944e-38, %v852
        %v854 = vsel %vm851, %v853, %v849
        %v855 = vmul.f32 1.0, %v854
        %v856 = vrcp.pop %v782
        %v857 = vmul.f32 %v782, %v856
        %v858 = vsub.f32 1.0, %v857
        %v859 = vmul.f32 %v856, %v858
        %v860 = vadd.f32 %v856, %v859
        %vm861 = vweird.f32 %v782
        %vm862 = vweird.f32 %v856
        %vm863 = vmor %vm861, %vm862
        %v864 = vsel %vm863, %v856, %v860
        %v865 = vand.u32 2147483647, %v782
        %vm866 = vcmp.eq.f32.partialorder %v865, 8.507059e+37
        %v867 = vand.u32 %v782, 2147483648
        %v868 = vor.u32 1.1754944e-38, %v867
        %v869 = vsel %vm866, %v868, %v864
        %v870 = vmul.f32 1.0, %v869
        %v871 = vrcp.pop %v783
        %v872 = vmul.f32 %v783, %v871
        %v873 = vsub.f32 1.0, %v872
        %v874 = vmul.f32 %v871, %v873
        %v875 = vadd.f32 %v871, %v874
        %vm876 = vweird.f32 %v783
        %vm877 = vweird.f32 %v871
        %vm878 = vmor %vm876, %vm877
        %v879 = vsel %vm878, %v871, %v875
        %v880 = vand.u32 2147483647, %v783
        %vm881 = vcmp.eq.f32.partialorder %v880, 8.507059e+37
        %v882 = vand.u32 %v783, 2147483648
        %v883 = vor.u32 1.1754944e-38, %v882
        %v884 = vsel %vm881, %v883, %v879
        %v885 = vmul.f32 1.0, %v884
        %v886 = vrcp.pop %v784
        %v887 = vmul.f32 %v784, %v886
        %v888 = vsub.f32 1.0, %v887
        %v889 = vmul.f32 %v886, %v888
        %v890 = vadd.f32 %v886, %v889
        %vm891 = vweird.f32 %v784
        %vm892 = vweird.f32 %v886
        %vm893 = vmor %vm891, %vm892
        %v894 = vsel %vm893, %v886, %v890
        %v895 = vand.u32 2147483647, %v784
        %vm896 = vcmp.eq.f32.partialorder %v895, 8.507059e+37
        %v897 = vand.u32 %v784, 2147483648
        %v898 = vor.u32 1.1754944e-38, %v897
        %v899 = vsel %vm896, %v898, %v894
        %v900 = vmul.f32 1.0, %v899
        %v901 = vrcp.pop %v785
        %v902 = vmul.f32 %v785, %v901
        %v903 = vsub.f32 1.0, %v902
        %v904 = vmul.f32 %v901, %v903
        %v905 = vadd.f32 %v901, %v904
        %vm906 = vweird.f32 %v785
        %vm907 = vweird.f32 %v901
        %vm908 = vmor %vm906, %vm907
        %v909 = vsel %vm908, %v901, %v905
        %v910 = vand.u32 2147483647, %v785
        %vm911 = vcmp.eq.f32.partialorder %v910, 8.507059e+37
        %v912 = vand.u32 %v785, 2147483648
        %v913 = vor.u32 1.1754944e-38, %v912
        %v914 = vsel %vm911, %v913, %v909
        %v915 = vmul.f32 1.0, %v914
        %v916 = vrcp.pop %v786
        %v917 = vmul.f32 %v786, %v916
        %v918 = vsub.f32 1.0, %v917
        %v919 = vmul.f32 %v916, %v918
        %v920 = vadd.f32 %v916, %v919
        %vm921 = vweird.f32 %v786
        %vm922 = vweird.f32 %v916
        %vm923 = vmor %vm921, %vm922
        %v924 = vsel %vm923, %v916, %v920
        %v925 = vand.u32 2147483647, %v786
        %vm926 = vcmp.eq.f32.partialorder %v925, 8.507059e+37
        %v927 = vand.u32 %v786, 2147483648
        %v928 = vor.u32 1.1754944e-38, %v927
        %v929 = vsel %vm926, %v928, %v924
        %v930 = vmul.f32 1.0, %v929
        %v931 = vrcp.pop %v787
        %v932 = vmul.f32 %v787, %v931
        %v933 = vsub.f32 1.0, %v932
        %v934 = vmul.f32 %v931, %v933
        %v935 = vadd.f32 %v931, %v934
        %vm936 = vweird.f32 %v787
        %vm937 = vweird.f32 %v931
        %vm938 = vmor %vm936, %vm937
        %v939 = vsel %vm938, %v931, %v935
        %v940 = vand.u32 2147483647, %v787
        %vm941 = vcmp.eq.f32.partialorder %v940, 8.507059e+37
        %v942 = vand.u32 %v787, 2147483648
        %v943 = vor.u32 1.1754944e-38, %v942
        %v944 = vsel %vm941, %v943, %v939
        %v945 = vmul.f32 1.0, %v944
        %v946 = vrcp.pop %v788
        %v947 = vmul.f32 %v788, %v946
        %v948 = vsub.f32 1.0, %v947
        %v949 = vmul.f32 %v946, %v948
        %v950 = vadd.f32 %v946, %v949
        %vm951 = vweird.f32 %v788
        %vm952 = vweird.f32 %v946
        %vm953 = vmor %vm951, %vm952
        %v954 = vsel %vm953, %v946, %v950
        %v955 = vand.u32 2147483647, %v788
        %vm956 = vcmp.eq.f32.partialorder %v955, 8.507059e+37
        %v957 = vand.u32 %v788, 2147483648
        %v958 = vor.u32 1.1754944e-38, %v957
        %v959 = vsel %vm956, %v958, %v954
        %v960 = vmul.f32 1.0, %v959
        %v961 = vrcp.pop %v789
        %v962 = vmul.f32 %v789, %v961
        %v963 = vsub.f32 1.0, %v962
        %v964 = vmul.f32 %v961, %v963
        %v965 = vadd.f32 %v961, %v964
        %vm966 = vweird.f32 %v789
        %vm967 = vweird.f32 %v961
        %vm968 = vmor %vm966, %vm967
        %v969 = vsel %vm968, %v961, %v965
        %v970 = vand.u32 2147483647, %v789
        %vm971 = vcmp.eq.f32.partialorder %v970, 8.507059e+37
        %v972 = vand.u32 %v789, 2147483648
        %v973 = vor.u32 1.1754944e-38, %v972
        %v974 = vsel %vm971, %v973, %v969
        %v975 = vmul.f32 1.0, %v974
        %v976 = vrcp.pop %v790
        %v977 = vmul.f32 %v790, %v976
        %v978 = vsub.f32 1.0, %v977
        %v979 = vmul.f32 %v976, %v978
        %v980 = vadd.f32 %v976, %v979
        %vm981 = vweird.f32 %v790
        %vm982 = vweird.f32 %v976
        %vm983 = vmor %vm981, %vm982
        %v984 = vsel %vm983, %v976, %v980
        %v985 = vand.u32 2147483647, %v790
        %vm986 = vcmp.eq.f32.partialorder %v985, 8.507059e+37
        %v987 = vand.u32 %v790, 2147483648
        %v988 = vor.u32 1.1754944e-38, %v987
        %v989 = vsel %vm986, %v988, %v984
        %v990 = vmul.f32 1.0, %v989
        %v991 = vrcp.pop %v791
        %v992 = vmul.f32 %v791, %v991
        %v993 = vsub.f32 1.0, %v992
        %v994 = vmul.f32 %v991, %v993
        %v995 = vadd.f32 %v991, %v994
        %vm996 = vweird.f32 %v791
        %vm997 = vweird.f32 %v991
        %vm998 = vmor %vm996, %vm997
        %v999 = vsel %vm998, %v991, %v995
        %v1000 = vand.u32 2147483647, %v791
        %vm1001 = vcmp.eq.f32.partialorder %v1000, 8.507059e+37
        %v1002 = vand.u32 %v791, 2147483648
        %v1003 = vor.u32 1.1754944e-38, %v1002
        %v1004 = vsel %vm1001, %v1003, %v999
        %v1005 = vmul.f32 1.0, %v1004
        %v1006 = vrcp.pop %v792
        %v1007 = vmul.f32 %v792, %v1006
        %v1008 = vsub.f32 1.0, %v1007
        %v1009 = vmul.f32 %v1006, %v1008
        %v1010 = vadd.f32 %v1006, %v1009
        %vm1011 = vweird.f32 %v792
        %vm1012 = vweird.f32 %v1006
        %vm1013 = vmor %vm1011, %vm1012
        %v1014 = vsel %vm1013, %v1006, %v1010
        %v1015 = vand.u32 2147483647, %v792
        %vm1016 = vcmp.eq.f32.partialorder %v1015, 8.507059e+37
        %v1017 = vand.u32 %v792, 2147483648
        %v1018 = vor.u32 1.1754944e-38, %v1017
        %v1019 = vsel %vm1016, %v1018, %v1014
        %v1020 = vmul.f32 1.0, %v1019
        %v1021 = vrcp.pop %v793
        %v1022 = vmul.f32 %v793, %v1021
        %v1023 = vsub.f32 1.0, %v1022
        %v1024 = vmul.f32 %v1021, %v1023
        %v1025 = vadd.f32 %v1021, %v1024
        %vm1026 = vweird.f32 %v793
        %vm1027 = vweird.f32 %v1021
        %vm1028 = vmor %vm1026, %vm1027
        %v1029 = vsel %vm1028, %v1021, %v1025
        %v1030 = vand.u32 2147483647, %v793
        %vm1031 = vcmp.eq.f32.partialorder %v1030, 8.507059e+37
        %v1032 = vand.u32 %v793, 2147483648
        %v1033 = vor.u32 1.1754944e-38, %v1032
        %v1034 = vsel %vm1031, %v1033, %v1029
        %v1035 = vmul.f32 1.0, %v1034
        %v1036 = vrcp.pop %v794
        %v1037 = vmul.f32 %v794, %v1036
        %v1038 = vsub.f32 1.0, %v1037
        %v1039 = vmul.f32 %v1036, %v1038
        %v1040 = vadd.f32 %v1036, %v1039
        %vm1041 = vweird.f32 %v794
        %vm1042 = vweird.f32 %v1036
        %vm1043 = vmor %vm1041, %vm1042
        %v1044 = vsel %vm1043, %v1036, %v1040
        %v1045 = vand.u32 2147483647, %v794
        %vm1046 = vcmp.eq.f32.partialorder %v1045, 8.507059e+37
        %v1047 = vand.u32 %v794, 2147483648
        %v1048 = vor.u32 1.1754944e-38, %v1047
        %v1049 = vsel %vm1046, %v1048, %v1044
        %v1050 = vmul.f32 1.0, %v1049
        %v1051 = vrcp.pop %v795
        %v1052 = vmul.f32 %v795, %v1051
        %v1053 = vsub.f32 1.0, %v1052
        %v1054 = vmul.f32 %v1051, %v1053
        %v1055 = vadd.f32 %v1051, %v1054
        %vm1056 = vweird.f32 %v795
        %vm1057 = vweird.f32 %v1051
        %vm1058 = vmor %vm1056, %vm1057
        %v1059 = vsel %vm1058, %v1051, %v1055
        %v1060 = vand.u32 2147483647, %v795
        %vm1061 = vcmp.eq.f32.partialorder %v1060, 8.507059e+37
        %v1062 = vand.u32 %v795, 2147483648
        %v1063 = vor.u32 1.1754944e-38, %v1062
        %v1064 = vsel %vm1061, %v1063, %v1059
        %v1065 = vmul.f32 1.0, %v1064
        %v1066 = vrcp.pop %v796
        %v1067 = vmul.f32 %v796, %v1066
        %v1068 = vsub.f32 1.0, %v1067
        %v1069 = vmul.f32 %v1066, %v1068
        %v1070 = vadd.f32 %v1066, %v1069
        %vm1071 = vweird.f32 %v796
        %vm1072 = vweird.f32 %v1066
        %vm1073 = vmor %vm1071, %vm1072
        %v1074 = vsel %vm1073, %v1066, %v1070
        %v1075 = vand.u32 2147483647, %v796
        %vm1076 = vcmp.eq.f32.partialorder %v1075, 8.507059e+37
        %v1077 = vand.u32 %v796, 2147483648
        %v1078 = vor.u32 1.1754944e-38, %v1077
        %v1079 = vsel %vm1076, %v1078, %v1074
        %v1080 = vmul.f32 1.0, %v1079
        %v1081 = vrcp.pop %v797
        %v1082 = vmul.f32 %v797, %v1081
        %v1083 = vsub.f32 1.0, %v1082
        %v1084 = vmul.f32 %v1081, %v1083
        %v1085 = vadd.f32 %v1081, %v1084
        %vm1086 = vweird.f32 %v797
        %vm1087 = vweird.f32 %v1081
        %vm1088 = vmor %vm1086, %vm1087
        %v1089 = vsel %vm1088, %v1081, %v1085
        %v1090 = vand.u32 2147483647, %v797
        %vm1091 = vcmp.eq.f32.partialorder %v1090, 8.507059e+37
        %v1092 = vand.u32 %v797, 2147483648
        %v1093 = vor.u32 1.1754944e-38, %v1092
        %v1094 = vsel %vm1091, %v1093, %v1089
        %v1095 = vmul.f32 1.0, %v1094
        %v1096 = vrcp.pop %v798
        %v1097 = vmul.f32 %v798, %v1096
        %v1098 = vsub.f32 1.0, %v1097
        %v1099 = vmul.f32 %v1096, %v1098
        %v1100 = vadd.f32 %v1096, %v1099
        %vm1101 = vweird.f32 %v798
        %vm1102 = vweird.f32 %v1096
        %vm1103 = vmor %vm1101, %vm1102
        %v1104 = vsel %vm1103, %v1096, %v1100
        %v1105 = vand.u32 2147483647, %v798
        %vm1106 = vcmp.eq.f32.partialorder %v1105, 8.507059e+37
        %v1107 = vand.u32 %v798, 2147483648
        %v1108 = vor.u32 1.1754944e-38, %v1107
        %v1109 = vsel %vm1106, %v1108, %v1104
        %v1110 = vmul.f32 1.0, %v1109
        %v1111 = vrcp.pop %v799
        %v1112 = vmul.f32 %v799, %v1111
        %v1113 = vsub.f32 1.0, %v1112
        %v1114 = vmul.f32 %v1111, %v1113
        %v1115 = vadd.f32 %v1111, %v1114
        %vm1116 = vweird.f32 %v799
        %vm1117 = vweird.f32 %v1111
        %vm1118 = vmor %vm1116, %vm1117
        %v1119 = vsel %vm1118, %v1111, %v1115
        %v1120 = vand.u32 2147483647, %v799
        %vm1121 = vcmp.eq.f32.partialorder %v1120, 8.507059e+37
        %v1122 = vand.u32 %v799, 2147483648
        %v1123 = vor.u32 1.1754944e-38, %v1122
        %v1124 = vsel %vm1121, %v1123, %v1119
        %v1125 = vmul.f32 1.0, %v1124
        %v1126 = vrcp.pop %v800
        %v1127 = vmul.f32 %v800, %v1126
        %v1128 = vsub.f32 1.0, %v1127
        %v1129 = vmul.f32 %v1126, %v1128
        %v1130 = vadd.f32 %v1126, %v1129
        %vm1131 = vweird.f32 %v800
        %vm1132 = vweird.f32 %v1126
        %vm1133 = vmor %vm1131, %vm1132
        %v1134 = vsel %vm1133, %v1126, %v1130
        %v1135 = vand.u32 2147483647, %v800
        %vm1136 = vcmp.eq.f32.partialorder %v1135, 8.507059e+37
        %v1137 = vand.u32 %v800, 2147483648
        %v1138 = vor.u32 1.1754944e-38, %v1137
        %v1139 = vsel %vm1136, %v1138, %v1134
        %v1140 = vmul.f32 1.0, %v1139
        %v1141 = vrcp.pop %v801
        %v1142 = vmul.f32 %v801, %v1141
        %v1143 = vsub.f32 1.0, %v1142
        %v1144 = vmul.f32 %v1141, %v1143
        %v1145 = vadd.f32 %v1141, %v1144
        %vm1146 = vweird.f32 %v801
        %vm1147 = vweird.f32 %v1141
        %vm1148 = vmor %vm1146, %vm1147
        %v1149 = vsel %vm1148, %v1141, %v1145
        %v1150 = vand.u32 2147483647, %v801
        %vm1151 = vcmp.eq.f32.partialorder %v1150, 8.507059e+37
        %v1152 = vand.u32 %v801, 2147483648
        %v1153 = vor.u32 1.1754944e-38, %v1152
        %v1154 = vsel %vm1151, %v1153, %v1149
        %v1155 = vmul.f32 1.0, %v1154
        %v1156 = vrcp.pop %v802
        %v1157 = vmul.f32 %v802, %v1156
        %v1158 = vsub.f32 1.0, %v1157
        %v1159 = vmul.f32 %v1156, %v1158
        %v1160 = vadd.f32 %v1156, %v1159
        %vm1161 = vweird.f32 %v802
        %vm1162 = vweird.f32 %v1156
        %vm1163 = vmor %vm1161, %vm1162
        %v1164 = vsel %vm1163, %v1156, %v1160
        %v1165 = vand.u32 2147483647, %v802
        %vm1166 = vcmp.eq.f32.partialorder %v1165, 8.507059e+37
        %v1167 = vand.u32 %v802, 2147483648
        %v1168 = vor.u32 1.1754944e-38, %v1167
        %v1169 = vsel %vm1166, %v1168, %v1164
        %v1170 = vmul.f32 1.0, %v1169
        %v1171 = vrcp.pop %v803
        %v1172 = vmul.f32 %v803, %v1171
        %v1173 = vsub.f32 1.0, %v1172
        %v1174 = vmul.f32 %v1171, %v1173
        %v1175 = vadd.f32 %v1171, %v1174
        %vm1176 = vweird.f32 %v803
        %vm1177 = vweird.f32 %v1171
        %vm1178 = vmor %vm1176, %vm1177
        %v1179 = vsel %vm1178, %v1171, %v1175
        %v1180 = vand.u32 2147483647, %v803
        %vm1181 = vcmp.eq.f32.partialorder %v1180, 8.507059e+37
        %v1182 = vand.u32 %v803, 2147483648
        %v1183 = vor.u32 1.1754944e-38, %v1182
        %v1184 = vsel %vm1181, %v1183, %v1179
        %v1185 = vmul.f32 1.0, %v1184
        %v1186 = vrcp.pop %v804
        %v1187 = vmul.f32 %v804, %v1186
        %v1188 = vsub.f32 1.0, %v1187
        %v1189 = vmul.f32 %v1186, %v1188
        %v1190 = vadd.f32 %v1186, %v1189
        %vm1191 = vweird.f32 %v804
        %vm1192 = vweird.f32 %v1186
        %vm1193 = vmor %vm1191, %vm1192
        %v1194 = vsel %vm1193, %v1186, %v1190
        %v1195 = vand.u32 2147483647, %v804
        %vm1196 = vcmp.eq.f32.partialorder %v1195, 8.507059e+37
        %v1197 = vand.u32 %v804, 2147483648
        %v1198 = vor.u32 1.1754944e-38, %v1197
        %v1199 = vsel %vm1196, %v1198, %v1194
        %v1200 = vmul.f32 1.0, %v1199
        %v1201 = vrcp.pop %v805
        %v1202 = vmul.f32 %v805, %v1201
        %v1203 = vsub.f32 1.0, %v1202
        %v1204 = vmul.f32 %v1201, %v1203
        %v1205 = vadd.f32 %v1201, %v1204
        %vm1206 = vweird.f32 %v805
        %vm1207 = vweird.f32 %v1201
        %vm1208 = vmor %vm1206, %vm1207
        %v1209 = vsel %vm1208, %v1201, %v1205
        %v1210 = vand.u32 2147483647, %v805
        %vm1211 = vcmp.eq.f32.partialorder %v1210, 8.507059e+37
        %v1212 = vand.u32 %v805, 2147483648
        %v1213 = vor.u32 1.1754944e-38, %v1212
        %v1214 = vsel %vm1211, %v1213, %v1209
        %v1215 = vmul.f32 1.0, %v1214
        %v1216 = vrcp.pop %v806
        %v1217 = vmul.f32 %v806, %v1216
        %v1218 = vsub.f32 1.0, %v1217
        %v1219 = vmul.f32 %v1216, %v1218
        %v1220 = vadd.f32 %v1216, %v1219
        %vm1221 = vweird.f32 %v806
        %vm1222 = vweird.f32 %v1216
        %vm1223 = vmor %vm1221, %vm1222
        %v1224 = vsel %vm1223, %v1216, %v1220
        %v1225 = vand.u32 2147483647, %v806
        %vm1226 = vcmp.eq.f32.partialorder %v1225, 8.507059e+37
        %v1227 = vand.u32 %v806, 2147483648
        %v1228 = vor.u32 1.1754944e-38, %v1227
        %v1229 = vsel %vm1226, %v1228, %v1224
        %v1230 = vmul.f32 1.0, %v1229
        %v1231 = vrcp.pop %v807
        %v1232 = vmul.f32 %v807, %v1231
        %v1233 = vsub.f32 1.0, %v1232
        %v1234 = vmul.f32 %v1231, %v1233
        %v1235 = vadd.f32 %v1231, %v1234
        %vm1236 = vweird.f32 %v807
        %vm1237 = vweird.f32 %v1231
        %vm1238 = vmor %vm1236, %vm1237
        %v1239 = vsel %vm1238, %v1231, %v1235
        %v1240 = vand.u32 2147483647, %v807
        %vm1241 = vcmp.eq.f32.partialorder %v1240, 8.507059e+37
        %v1242 = vand.u32 %v807, 2147483648
        %v1243 = vor.u32 1.1754944e-38, %v1242
        %v1244 = vsel %vm1241, %v1243, %v1239
        %v1245 = vmul.f32 1.0, %v1244
        %v1246 = vrcp.pop %v808
        %v1247 = vmul.f32 %v808, %v1246
        %v1248 = vsub.f32 1.0, %v1247
        %v1249 = vmul.f32 %v1246, %v1248
        %v1250 = vadd.f32 %v1246, %v1249
        %vm1251 = vweird.f32 %v808
        %vm1252 = vweird.f32 %v1246
        %vm1253 = vmor %vm1251, %vm1252
        %v1254 = vsel %vm1253, %v1246, %v1250
        %v1255 = vand.u32 2147483647, %v808
        %vm1256 = vcmp.eq.f32.partialorder %v1255, 8.507059e+37
        %v1257 = vand.u32 %v808, 2147483648
        %v1258 = vor.u32 1.1754944e-38, %v1257
        %v1259 = vsel %vm1256, %v1258, %v1254
        %v1260 = vmul.f32 1.0, %v1259
        %v1261 = vrcp.pop %v809
        %v1262 = vmul.f32 %v809, %v1261
        %v1263 = vsub.f32 1.0, %v1262
        %v1264 = vmul.f32 %v1261, %v1263
        %v1265 = vadd.f32 %v1261, %v1264
        %vm1266 = vweird.f32 %v809
        %vm1267 = vweird.f32 %v1261
        %vm1268 = vmor %vm1266, %vm1267
        %v1269 = vsel %vm1268, %v1261, %v1265
        %v1270 = vand.u32 2147483647, %v809
        %vm1271 = vcmp.eq.f32.partialorder %v1270, 8.507059e+37
        %v1272 = vand.u32 %v809, 2147483648
        %v1273 = vor.u32 1.1754944e-38, %v1272
        %v1274 = vsel %vm1271, %v1273, %v1269
        %v1275 = vmul.f32 1.0, %v1274
        %v1276 = vrcp.pop %v810
        %v1277 = vmul.f32 %v810, %v1276
        %v1278 = vsub.f32 1.0, %v1277
        %v1279 = vmul.f32 %v1276, %v1278
        %v1280 = vadd.f32 %v1276, %v1279
        %vm1281 = vweird.f32 %v810
        %vm1282 = vweird.f32 %v1276
        %vm1283 = vmor %vm1281, %vm1282
        %v1284 = vsel %vm1283, %v1276, %v1280
        %v1285 = vand.u32 2147483647, %v810
        %vm1286 = vcmp.eq.f32.partialorder %v1285, 8.507059e+37
        %v1287 = vand.u32 %v810, 2147483648
        %v1288 = vor.u32 1.1754944e-38, %v1287
        %v1289 = vsel %vm1286, %v1288, %v1284
        %v1290 = vmul.f32 1.0, %v1289
        %1291 = vst [vmem:[%s277] sm:$0xff] %v825
        %1292 = vst [vmem:[%s277 + $0x8] sm:$0xff] %v840
        %1293 = vst [vmem:[%s277 + $0x10] sm:$0xff] %v855
        %1294 = vst [vmem:[%s277 + $0x18] sm:$0xff] %v870
        %1295 = vst [vmem:[%s277 + $0x20] sm:$0xff] %v885
        %1296 = vst [vmem:[%s277 + $0x28] sm:$0xff] %v900
        %1297 = vst [vmem:[%s277 + $0x30] sm:$0xff] %v915
        %1298 = vst [vmem:[%s277 + $0x38] sm:$0xff] %v930
        %1299 = vst [vmem:[%s277 + $0x40] sm:$0xff] %v945
        %1300 = vst [vmem:[%s277 + $0x48] sm:$0xff] %v960
        %1301 = vst [vmem:[%s277 + $0x50] sm:$0xff] %v975
        %1302 = vst [vmem:[%s277 + $0x58] sm:$0xff] %v990
        %1303 = vst [vmem:[%s277 + $0x60] sm:$0xff] %v1005
        %1304 = vst [vmem:[%s277 + $0x68] sm:$0xff] %v1020
        %1305 = vst [vmem:[%s277 + $0x70] sm:$0xff] %v1035
        %1306 = vst [vmem:[%s277 + $0x78] sm:$0xff] %v1050
        %1307 = vst [vmem:[%s277 + $0x80] sm:$0xff] %v1065
        %1308 = vst [vmem:[%s277 + $0x88] sm:$0xff] %v1080
        %1309 = vst [vmem:[%s277 + $0x90] sm:$0xff] %v1095
        %1310 = vst [vmem:[%s277 + $0x98] sm:$0xff] %v1110
        %1311 = vst [vmem:[%s277 + $0xa0] sm:$0xff] %v1125
        %1312 = vst [vmem:[%s277 + $0xa8] sm:$0xff] %v1140
        %1313 = vst [vmem:[%s277 + $0xb0] sm:$0xff] %v1155
        %1314 = vst [vmem:[%s277 + $0xb8] sm:$0xff] %v1170
        %1315 = vst [vmem:[%s277 + $0xc0] sm:$0xff] %v1185
        %1316 = vst [vmem:[%s277 + $0xc8] sm:$0xff] %v1200
        %1317 = vst [vmem:[%s277 + $0xd0] sm:$0xff] %v1215
        %1318 = vst [vmem:[%s277 + $0xd8] sm:$0xff] %v1230
        %1319 = vst [vmem:[%s277 + $0xe0] sm:$0xff] %v1245
        %1320 = vst [vmem:[%s277 + $0xe8] sm:$0xff] %v1260
        %1321 = vst [vmem:[%s277 + $0xf0] sm:$0xff] %v1275
        %1322 = vst [vmem:[%s277 + $0xf8] sm:$0xff] %v1290
        %s1323 = sand.u32 %s161, 1
        %s1324 = scalar_lea.sflag [#allocation4], %s1323
        %s1325 = sand.u32 %s161, 1
        %s1326 = smul.addr %s1325, 256
        %s1327 = scalar_lea.vmem [#allocation5], %s1326
        // Predicated region
        $region45: #{tpu_custom_call.1} parent=39 // pred_check
          %p1328 = pneg %p171
        $region46: #{tpu_custom_call.1} parent=39 // pred_check_branch
          %1330 = sbr.rel (%p1328) target = $region48
        $region47: #{tpu_custom_call.1} parent=39 // pred_region
          %s1331 = smul.u32 4, %s27
          %1333 = vsyncadd %s1324, 0
          %s1334 = smul.addr %s26, 64
          %s1335 = sadd.s32 %s1331, %s1334
          %s1336 = smul.addr %s1335, 8
          %s1337 = scalar_lea.hbm %s5, %s1336
          %s1338 = sshll.u32 %s1327, 4
          %s1339 = int_to_ptr.vmem [resolvable:$true] %s1338
          %s1340 = sshll.u32 %s1337, 4
          %s1341 = int_to_ptr.hbm [resolvable:$true] %s1340
          %1346 = dma.vmem_to_hbm [thread:$0]  %s1339, 4096, %s1341, %s1324, 512, 1024, 32
        $region48: #{tpu_custom_call.1} parent=39 // pred_fallthru
          _
      $region40: #{tpu_custom_call.1} parent=5 // pred_fallthru
        _
      %p1347 = scmp.le.s32.totalorder 2, %s17
      // Predicated region
      $region49: #{tpu_custom_call.1} parent=5 // pred_check
        %p1348 = pneg %p1347
      $region50: #{tpu_custom_call.1} parent=5 // pred_check_branch
        %1350 = sbr.rel (%p1348) target = $region52
      $region51: #{tpu_custom_call.1} parent=5 // pred_region
        %s1351 = ssub.s32 %s17, 2
        // Predicated region
        $region53: #{tpu_custom_call.1} parent=51 // pred_check
          %p1352 = pneg %p177
        $region54: #{tpu_custom_call.1} parent=51 // pred_check_branch
          %1354 = sbr.rel (%p1352) target = $region56
        $region55: #{tpu_custom_call.1} parent=51 // pred_region
          %s1355 = sand.u32 %s162, 1
          %s1356 = scalar_lea.sflag [#allocation4], %s1355
          %s1357 = sand.u32 %s162, 1
          %s1358 = smul.addr %s1357, 256
          %s1359 = scalar_lea.vmem [#allocation5], %s1358
          %1361 = dma.done %s1356, 4096
        $region56: #{tpu_custom_call.1} parent=51 // pred_fallthru
          _
      $region52: #{tpu_custom_call.1} parent=5 // pred_fallthru
        _
    $region6: #{tpu_custom_call.1} parent=1 // loop_footer
      %s21 = sadd.s32 1, %s17
    $region7: #{tpu_custom_call.1} parent=1 // loop_footer_branch
      %16 = sbr.rel target = $region3
    $region8: #{tpu_custom_call.1} parent=1 // loop_exit
      _
    %1362 = vsyncpa [#allocation3], 1
    %s1363 = scalar_lea.sflag [#allocation3], 1
    %1364 = vsyncpa %s1363, 1
    %1365 = vsyncpa [#allocation4], 1
    %s1366 = scalar_lea.sflag [#allocation4], 1
    %1367 = vsyncpa %s1366, 1

</llo_original>
